<compile_context>
chip_gen: v5e
topology: v5e:2x2
jax: 0.10.0
libtpu: 0.0.40
codegen_flags: <defaults>
</compile_context>

<pallas_src>
import jax
import jax.numpy as jnp
from jax.experimental import pallas as pl
from jax.experimental.pallas import tpu as pltpu

SUBLANE = 8    # f32 sublane tile
LANE = 128     # lane tile


def lstm_forward_kernel(x_ref,      # [T*Bp, E]   bf16 embedded inputs (time-major, Bp-padded)
                        h0_ref,     # [Bp, H]     f32
                        c0_ref,     # [Bp, H]     f32
                        wih_ref,    # [E, 4H]     bf16 pre-transposed W_ih
                        whh_ref,    # [H, 4H]     f32  pre-transposed W_hh (recurrent path stays f32)
                        b_ref,      # [1, 4H]     f32  b_ih + b_hh (pre-fused)
                        wmlp_ref,   # [H, Vpad]   bf16 pre-transposed, lane-padded mlp weight
                        bmlp_ref,   # [1, Vpad]   f32
                        out_ref,    # [T*Bp, Vpad] f32 logits (lane-dense slab)
                        hn_ref,     # [Bp, H]
                        cn_ref):    # [Bp, H]
    Bp = h0_ref.shape[0]
    H = h0_ref.shape[1]
    T = x_ref.shape[0] // Bp

    whh = whh_ref[...]

    # ---- Hoisted input-side gate matmul + fused bias: ONE bf16 MXU call ----
    x_gates = (jnp.dot(x_ref[...], wih_ref[...],
                       preferred_element_type=jnp.float32)
               + b_ref[...])                                    # [T*Bp, 4H] f32

    h = h0_ref[...]
    c = c0_ref[...]
    hs = []

    # ---- Static full unroll of the recurrence (T is small & static) ----
    for t in range(T):
        # Bp == 8  =>  each per-step block is exactly one aligned (8,128) tile.
        gates = x_gates[t * Bp:(t + 1) * Bp, :] + jnp.dot(
            h, whh, preferred_element_type=jnp.float32)         # [Bp, 4H]
        # Whole-vreg activations: 2 EUP passes per step instead of 4.
        sig = jax.nn.sigmoid(gates)
        tnh = jnp.tanh(gates)
        # PyTorch nn.LSTM gate order: i, f, g, o. (32-lane extracts ride the XLU.)
        i_g = sig[:, 0 * H:1 * H]
        f_g = sig[:, 1 * H:2 * H]
        g_g = tnh[:, 2 * H:3 * H]
        o_g = sig[:, 3 * H:4 * H]
        c = f_g * c + i_g * g_g
        h = o_g * jnp.tanh(c)
        hs.append(h)                     # stays in vregs, no VMEM round trip

    hn_ref[...] = h
    cn_ref[...] = c

    # ---- Hoisted vocab projection: one bf16 MXU call, one unmasked
    #      lane-dense store.  (Dropout is identity in eval mode.) ----
    h_hist = jnp.concatenate(hs, axis=0).astype(jnp.bfloat16)   # [T*Bp, H]
    out_ref[...] = (jnp.dot(h_hist, wmlp_ref[...],
                            preferred_element_type=jnp.float32)
                    + bmlp_ref[...])                            # [T*Bp, Vpad]


def lst_model_forward(x_tokens, hidden, packed):
    """x_tokens: int32 [T, B, 1]; hidden: (h0, c0) each [1, B, H]; packed params."""
    emb = packed["embedding"]          # [V, E]  bf16
    wih_t = packed["wih_t"]            # [E, 4H] bf16
    whh_t = packed["whh_t"]            # [H, 4H] f32
    b = packed["b"]                    # [1, 4H] f32
    wmlp_t = packed["wmlp_t"]          # [H, Vpad] bf16
    bmlp = packed["bmlp"]              # [1, Vpad] f32

    T, B, _ = x_tokens.shape
    V, E = emb.shape
    H = whh_t.shape[0]
    Vpad = wmlp_t.shape[1]
    Bp = ((B + SUBLANE - 1) // SUBLANE) * SUBLANE   # pad batch to the f32 sublane tile

    # Glue: embedding lookup (+ squeeze(2)), pad batch to Bp, flatten time-major.
    # TODO(synk): at production vocab sizes move this gather into the kernel.
    x_emb = jnp.take(emb, x_tokens[..., 0], axis=0)                    # [T, B, E] bf16
    x_emb = jnp.pad(x_emb, ((0, 0), (0, Bp - B), (0, 0))).reshape(T * Bp, E)
    h0 = jnp.pad(hidden[0][0], ((0, Bp - B), (0, 0)))                  # [Bp, H]
    c0 = jnp.pad(hidden[1][0], ((0, Bp - B), (0, 0)))                  # [Bp, H]

    vmem = pl.BlockSpec(memory_space=pltpu.MemorySpace.VMEM)
    out_flat, h_n, c_n = pl.pallas_call(
        lstm_forward_kernel,
        out_shape=(
            jax.ShapeDtypeStruct((T * Bp, Vpad), jnp.float32),
            jax.ShapeDtypeStruct((Bp, H), jnp.float32),
            jax.ShapeDtypeStruct((Bp, H), jnp.float32),
        ),
        in_specs=[vmem] * 8,
        out_specs=(vmem, vmem, vmem),
        # TODO(synk): at scaled (T*B, V) add a grid over row/vocab tiles with
        # dimension_semantics=("parallel","parallel") and explicit vmem_limit_bytes
        # (hits v7x's 64 MiB VMEM ceiling first).
    )(x_emb, h0, c0, wih_t, whh_t, b, wmlp_t, bmlp)

    out = out_flat.reshape(T, Bp, Vpad)[:, :B, :V]
    return out, (h_n[:B][None], c_n[:B][None])


def init_params(key, input_size, hidden_size, embedding_size):
    """PyTorch-layout parameters (what nn.Embedding / nn.LSTM / nn.Linear hold)."""
    ks = jax.random.split(key, 7)
    scale = 0.1
    return {
        "embedding": scale * jax.random.normal(ks[0], (input_size, embedding_size), jnp.float32),
        "w_ih": scale * jax.random.normal(ks[1], (4 * hidden_size, embedding_size), jnp.float32),
        "w_hh": scale * jax.random.normal(ks[2], (4 * hidden_size, hidden_size), jnp.float32),
        "b_ih": scale * jax.random.normal(ks[3], (4 * hidden_size,), jnp.float32),
        "b_hh": scale * jax.random.normal(ks[4], (4 * hidden_size,), jnp.float32),
        "w_mlp": scale * jax.random.normal(ks[5], (input_size, hidden_size), jnp.float32),
        "b_mlp": scale * jax.random.normal(ks[6], (input_size,), jnp.float32),
    }


def pack_params(p, lane=LANE):
    """One-time transposes, bias fusion, vocab lane-padding, bf16 MXU weight casts."""
    V, H = p["w_mlp"].shape
    vpad = ((V + lane - 1) // lane) * lane
    wmlp_t = jnp.zeros((H, vpad), jnp.float32).at[:, :V].set(p["w_mlp"].T)
    bmlp = jnp.zeros((1, vpad), jnp.float32).at[0, :V].set(p["b_mlp"])
    return {
        # bf16 operands for the two hoisted (throughput-dominant) matmuls.
        "embedding": p["embedding"].astype(jnp.bfloat16),        # [V, E]
        "wih_t": p["w_ih"].T.astype(jnp.bfloat16),               # [E, 4H]
        "wmlp_t": wmlp_t.astype(jnp.bfloat16),                   # [H, Vpad]
        # Recurrent / elementwise path stays f32 (v5e VPU/EUP are f32-only).
        "whh_t": p["w_hh"].T,                                    # [H, 4H]
        "b": (p["b_ih"] + p["b_hh"])[None, :],                   # [1, 4H]
        "bmlp": bmlp,                                            # [1, Vpad]
    }


def lst_model_reference(x_tokens, hidden, p):
    """Pure-JAX f32 reference (PyTorch semantics) for correctness checking."""
    T, B, _ = x_tokens.shape
    H = p["w_hh"].shape[1]
    hp = jax.lax.Precision.HIGHEST
    x = jnp.take(p["embedding"], x_tokens[..., 0], axis=0)      # [T, B, E]
    h, c = hidden[0][0], hidden[1][0]
    b = p["b_ih"] + p["b_hh"]
    outs = []
    for t in range(T):
        gates = (jnp.dot(x[t], p["w_ih"].T, precision=hp)
                 + jnp.dot(h, p["w_hh"].T, precision=hp) + b)
        i = jax.nn.sigmoid(gates[:, 0 * H:1 * H])
        f = jax.nn.sigmoid(gates[:, 1 * H:2 * H])
        g = jnp.tanh(gates[:, 2 * H:3 * H])
        o = jax.nn.sigmoid(gates[:, 3 * H:4 * H])
        c = f * c + i * g
        h = o * jnp.tanh(c)
        outs.append(h)
    out = jnp.stack(outs)                                        # [T, B, H]
    logits = jnp.dot(out, p["w_mlp"].T, precision=hp) + p["b_mlp"]
    return logits, (h[None], c[None])


if __name__ == "__main__":
    INPUT_SIZE = 64      # vocab size
    HIDDEN = 32
    EMB = 16
    SEQ = 8
    BATCH = 2
    LAYERS = 1

    key = jax.random.PRNGKey(0)
    k_param, k_tok = jax.random.split(key)
    params = init_params(k_param, INPUT_SIZE, HIDDEN, EMB)
    packed = pack_params(params)

    x_tokens = jax.random.randint(k_tok, (SEQ, BATCH, 1), 0, INPUT_SIZE, dtype=jnp.int32)
    hidden = (jnp.zeros((LAYERS, BATCH, HIDDEN), jnp.float32),
              jnp.zeros((LAYERS, BATCH, HIDDEN), jnp.float32))

    fwd = jax.jit(lst_model_forward)
    logits, (h_n, c_n) = fwd(x_tokens, hidden, packed)
    jax.block_until_ready((logits, h_n, c_n))

    assert logits.shape == (SEQ, BATCH, INPUT_SIZE)
    assert h_n.shape == (LAYERS, BATCH, HIDDEN)
    assert c_n.shape == (LAYERS, BATCH, HIDDEN)

    # Correctness vs. pure-JAX f32 reference (loose tol covers bf16 MXU weights).
    ref_logits, (ref_h, ref_c) = lst_model_reference(x_tokens, hidden, params)
    assert jnp.allclose(logits, ref_logits, atol=2e-2, rtol=2e-2)
    assert jnp.allclose(h_n, ref_h, atol=2e-2, rtol=2e-2)
    assert jnp.allclose(c_n, ref_c, atol=2e-2, rtol=2e-2)

    print("KERNEL_OK")
</pallas_src>

<mosaic_0001>
module attributes {stable_mosaic.version = 11 : i64} {
  func.func @lstm_forward_kernel(%arg0: memref<64x16xbf16, #tpu.memory_space<vmem>>, %arg1: memref<8x32xf32, #tpu.memory_space<vmem>>, %arg2: memref<8x32xf32, #tpu.memory_space<vmem>>, %arg3: memref<16x128xbf16, #tpu.memory_space<vmem>>, %arg4: memref<32x128xf32, #tpu.memory_space<vmem>>, %arg5: memref<1x128xf32, #tpu.memory_space<vmem>>, %arg6: memref<32x128xbf16, #tpu.memory_space<vmem>>, %arg7: memref<1x128xf32, #tpu.memory_space<vmem>>, %arg8: memref<64x128xf32, #tpu.memory_space<vmem>>, %arg9: memref<8x32xf32, #tpu.memory_space<vmem>>, %arg10: memref<8x32xf32, #tpu.memory_space<vmem>>) attributes {dimension_semantics = [], scalar_prefetch = 0 : i64, scratch_operands = 0 : i64, tpu.core_type = #tpu.core_type<tc>} {
    %c0 = arith.constant 0 : index
    %c0_0 = arith.constant 0 : index
    %0 = vector.load %arg4[%c0, %c0_0] : memref<32x128xf32, #tpu.memory_space<vmem>>, vector<32x128xf32>
    %c0_1 = arith.constant 0 : index
    %c0_2 = arith.constant 0 : index
    %1 = vector.load %arg0[%c0_1, %c0_2] : memref<64x16xbf16, #tpu.memory_space<vmem>>, vector<64x16xbf16>
    %c0_3 = arith.constant 0 : index
    %c0_4 = arith.constant 0 : index
    %2 = vector.load %arg3[%c0_3, %c0_4] : memref<16x128xbf16, #tpu.memory_space<vmem>>, vector<16x128xbf16>
    %cst = arith.constant dense<0.000000e+00> : vector<64x128xf32>
    %3 = tpu.matmul %1, %2, %cst {dimension_numbers = #tpu.dot_dimension_numbers<[1], [0], [0], [1], [0, 0, 1, 1], [], []>} : vector<64x16xbf16>, vector<16x128xbf16>, vector<64x128xf32> -> vector<64x128xf32>
    %c0_5 = arith.constant 0 : index
    %c0_6 = arith.constant 0 : index
    %4 = vector.load %arg5[%c0_5, %c0_6] : memref<1x128xf32, #tpu.memory_space<vmem>>, vector<1x128xf32>
    %5 = vector.broadcast %4 : vector<1x128xf32> to vector<64x128xf32>
    %6 = arith.addf %3, %5 : vector<64x128xf32>
    %c0_7 = arith.constant 0 : index
    %c0_8 = arith.constant 0 : index
    %7 = vector.load %arg1[%c0_7, %c0_8] : memref<8x32xf32, #tpu.memory_space<vmem>>, vector<8x32xf32>
    %c0_9 = arith.constant 0 : index
    %c0_10 = arith.constant 0 : index
    %8 = vector.load %arg2[%c0_9, %c0_10] : memref<8x32xf32, #tpu.memory_space<vmem>>, vector<8x32xf32>
    %9 = vector.extract_strided_slice %6 {offsets = [0, 0], sizes = [8, 128], strides = [1, 1]} : vector<64x128xf32> to vector<8x128xf32>
    %cst_11 = arith.constant dense<0.000000e+00> : vector<8x128xf32>
    %10 = tpu.matmul %7, %0, %cst_11 {dimension_numbers = #tpu.dot_dimension_numbers<[1], [0], [0], [1], [0, 0, 1, 1], [], []>} : vector<8x32xf32>, vector<32x128xf32>, vector<8x128xf32> -> vector<8x128xf32>
    %11 = arith.addf %9, %10 : vector<8x128xf32>
    %12 = arith.negf %11 : vector<8x128xf32>
    %13 = math.exp %12 : vector<8x128xf32>
    %cst_12 = arith.constant 1.000000e+00 : f32
    %14 = vector.broadcast %cst_12 : f32 to vector<8x128xf32>
    %15 = arith.addf %14, %13 : vector<8x128xf32>
    %16 = arith.divf %14, %15 : vector<8x128xf32>
    %17 = math.tanh %11 : vector<8x128xf32>
    %18 = vector.extract_strided_slice %16 {offsets = [0, 0], sizes = [8, 32], strides = [1, 1]} : vector<8x128xf32> to vector<8x32xf32>
    %19 = vector.extract_strided_slice %16 {offsets = [0, 32], sizes = [8, 32], strides = [1, 1]} : vector<8x128xf32> to vector<8x32xf32>
    %20 = vector.extract_strided_slice %17 {offsets = [0, 64], sizes = [8, 32], strides = [1, 1]} : vector<8x128xf32> to vector<8x32xf32>
    %21 = vector.extract_strided_slice %16 {offsets = [0, 96], sizes = [8, 32], strides = [1, 1]} : vector<8x128xf32> to vector<8x32xf32>
    %22 = arith.mulf %19, %8 : vector<8x32xf32>
    %23 = arith.mulf %18, %20 : vector<8x32xf32>
    %24 = arith.addf %22, %23 : vector<8x32xf32>
    %25 = math.tanh %24 : vector<8x32xf32>
    %26 = arith.mulf %21, %25 : vector<8x32xf32>
    %27 = vector.extract_strided_slice %6 {offsets = [8, 0], sizes = [8, 128], strides = [1, 1]} : vector<64x128xf32> to vector<8x128xf32>
    %cst_13 = arith.constant dense<0.000000e+00> : vector<8x128xf32>
    %28 = tpu.matmul %26, %0, %cst_13 {dimension_numbers = #tpu.dot_dimension_numbers<[1], [0], [0], [1], [0, 0, 1, 1], [], []>} : vector<8x32xf32>, vector<32x128xf32>, vector<8x128xf32> -> vector<8x128xf32>
    %29 = arith.addf %27, %28 : vector<8x128xf32>
    %30 = arith.negf %29 : vector<8x128xf32>
    %31 = math.exp %30 : vector<8x128xf32>
    %cst_14 = arith.constant 1.000000e+00 : f32
    %32 = vector.broadcast %cst_14 : f32 to vector<8x128xf32>
    %33 = arith.addf %32, %31 : vector<8x128xf32>
    %34 = arith.divf %32, %33 : vector<8x128xf32>
    %35 = math.tanh %29 : vector<8x128xf32>
    %36 = vector.extract_strided_slice %34 {offsets = [0, 0], sizes = [8, 32], strides = [1, 1]} : vector<8x128xf32> to vector<8x32xf32>
    %37 = vector.extract_strided_slice %34 {offsets = [0, 32], sizes = [8, 32], strides = [1, 1]} : vector<8x128xf32> to vector<8x32xf32>
    %38 = vector.extract_strided_slice %35 {offsets = [0, 64], sizes = [8, 32], strides = [1, 1]} : vector<8x128xf32> to vector<8x32xf32>
    %39 = vector.extract_strided_slice %34 {offsets = [0, 96], sizes = [8, 32], strides = [1, 1]} : vector<8x128xf32> to vector<8x32xf32>
    %40 = arith.mulf %37, %24 : vector<8x32xf32>
    %41 = arith.mulf %36, %38 : vector<8x32xf32>
    %42 = arith.addf %40, %41 : vector<8x32xf32>
    %43 = math.tanh %42 : vector<8x32xf32>
    %44 = arith.mulf %39, %43 : vector<8x32xf32>
    %45 = vector.extract_strided_slice %6 {offsets = [16, 0], sizes = [8, 128], strides = [1, 1]} : vector<64x128xf32> to vector<8x128xf32>
    %cst_15 = arith.constant dense<0.000000e+00> : vector<8x128xf32>
    %46 = tpu.matmul %44, %0, %cst_15 {dimension_numbers = #tpu.dot_dimension_numbers<[1], [0], [0], [1], [0, 0, 1, 1], [], []>} : vector<8x32xf32>, vector<32x128xf32>, vector<8x128xf32> -> vector<8x128xf32>
    %47 = arith.addf %45, %46 : vector<8x128xf32>
    %48 = arith.negf %47 : vector<8x128xf32>
    %49 = math.exp %48 : vector<8x128xf32>
    %cst_16 = arith.constant 1.000000e+00 : f32
    %50 = vector.broadcast %cst_16 : f32 to vector<8x128xf32>
    %51 = arith.addf %50, %49 : vector<8x128xf32>
    %52 = arith.divf %50, %51 : vector<8x128xf32>
    %53 = math.tanh %47 : vector<8x128xf32>
    %54 = vector.extract_strided_slice %52 {offsets = [0, 0], sizes = [8, 32], strides = [1, 1]} : vector<8x128xf32> to vector<8x32xf32>
    %55 = vector.extract_strided_slice %52 {offsets = [0, 32], sizes = [8, 32], strides = [1, 1]} : vector<8x128xf32> to vector<8x32xf32>
    %56 = vector.extract_strided_slice %53 {offsets = [0, 64], sizes = [8, 32], strides = [1, 1]} : vector<8x128xf32> to vector<8x32xf32>
    %57 = vector.extract_strided_slice %52 {offsets = [0, 96], sizes = [8, 32], strides = [1, 1]} : vector<8x128xf32> to vector<8x32xf32>
    %58 = arith.mulf %55, %42 : vector<8x32xf32>
    %59 = arith.mulf %54, %56 : vector<8x32xf32>
    %60 = arith.addf %58, %59 : vector<8x32xf32>
    %61 = math.tanh %60 : vector<8x32xf32>
    %62 = arith.mulf %57, %61 : vector<8x32xf32>
    %63 = vector.extract_strided_slice %6 {offsets = [24, 0], sizes = [8, 128], strides = [1, 1]} : vector<64x128xf32> to vector<8x128xf32>
    %cst_17 = arith.constant dense<0.000000e+00> : vector<8x128xf32>
    %64 = tpu.matmul %62, %0, %cst_17 {dimension_numbers = #tpu.dot_dimension_numbers<[1], [0], [0], [1], [0, 0, 1, 1], [], []>} : vector<8x32xf32>, vector<32x128xf32>, vector<8x128xf32> -> vector<8x128xf32>
    %65 = arith.addf %63, %64 : vector<8x128xf32>
    %66 = arith.negf %65 : vector<8x128xf32>
    %67 = math.exp %66 : vector<8x128xf32>
    %cst_18 = arith.constant 1.000000e+00 : f32
    %68 = vector.broadcast %cst_18 : f32 to vector<8x128xf32>
    %69 = arith.addf %68, %67 : vector<8x128xf32>
    %70 = arith.divf %68, %69 : vector<8x128xf32>
    %71 = math.tanh %65 : vector<8x128xf32>
    %72 = vector.extract_strided_slice %70 {offsets = [0, 0], sizes = [8, 32], strides = [1, 1]} : vector<8x128xf32> to vector<8x32xf32>
    %73 = vector.extract_strided_slice %70 {offsets = [0, 32], sizes = [8, 32], strides = [1, 1]} : vector<8x128xf32> to vector<8x32xf32>
    %74 = vector.extract_strided_slice %71 {offsets = [0, 64], sizes = [8, 32], strides = [1, 1]} : vector<8x128xf32> to vector<8x32xf32>
    %75 = vector.extract_strided_slice %70 {offsets = [0, 96], sizes = [8, 32], strides = [1, 1]} : vector<8x128xf32> to vector<8x32xf32>
    %76 = arith.mulf %73, %60 : vector<8x32xf32>
    %77 = arith.mulf %72, %74 : vector<8x32xf32>
    %78 = arith.addf %76, %77 : vector<8x32xf32>
    %79 = math.tanh %78 : vector<8x32xf32>
    %80 = arith.mulf %75, %79 : vector<8x32xf32>
    %81 = vector.extract_strided_slice %6 {offsets = [32, 0], sizes = [8, 128], strides = [1, 1]} : vector<64x128xf32> to vector<8x128xf32>
    %cst_19 = arith.constant dense<0.000000e+00> : vector<8x128xf32>
    %82 = tpu.matmul %80, %0, %cst_19 {dimension_numbers = #tpu.dot_dimension_numbers<[1], [0], [0], [1], [0, 0, 1, 1], [], []>} : vector<8x32xf32>, vector<32x128xf32>, vector<8x128xf32> -> vector<8x128xf32>
    %83 = arith.addf %81, %82 : vector<8x128xf32>
    %84 = arith.negf %83 : vector<8x128xf32>
    %85 = math.exp %84 : vector<8x128xf32>
    %cst_20 = arith.constant 1.000000e+00 : f32
    %86 = vector.broadcast %cst_20 : f32 to vector<8x128xf32>
    %87 = arith.addf %86, %85 : vector<8x128xf32>
    %88 = arith.divf %86, %87 : vector<8x128xf32>
    %89 = math.tanh %83 : vector<8x128xf32>
    %90 = vector.extract_strided_slice %88 {offsets = [0, 0], sizes = [8, 32], strides = [1, 1]} : vector<8x128xf32> to vector<8x32xf32>
    %91 = vector.extract_strided_slice %88 {offsets = [0, 32], sizes = [8, 32], strides = [1, 1]} : vector<8x128xf32> to vector<8x32xf32>
    %92 = vector.extract_strided_slice %89 {offsets = [0, 64], sizes = [8, 32], strides = [1, 1]} : vector<8x128xf32> to vector<8x32xf32>
    %93 = vector.extract_strided_slice %88 {offsets = [0, 96], sizes = [8, 32], strides = [1, 1]} : vector<8x128xf32> to vector<8x32xf32>
    %94 = arith.mulf %91, %78 : vector<8x32xf32>
    %95 = arith.mulf %90, %92 : vector<8x32xf32>
    %96 = arith.addf %94, %95 : vector<8x32xf32>
    %97 = math.tanh %96 : vector<8x32xf32>
    %98 = arith.mulf %93, %97 : vector<8x32xf32>
    %99 = vector.extract_strided_slice %6 {offsets = [40, 0], sizes = [8, 128], strides = [1, 1]} : vector<64x128xf32> to vector<8x128xf32>
    %cst_21 = arith.constant dense<0.000000e+00> : vector<8x128xf32>
    %100 = tpu.matmul %98, %0, %cst_21 {dimension_numbers = #tpu.dot_dimension_numbers<[1], [0], [0], [1], [0, 0, 1, 1], [], []>} : vector<8x32xf32>, vector<32x128xf32>, vector<8x128xf32> -> vector<8x128xf32>
    %101 = arith.addf %99, %100 : vector<8x128xf32>
    %102 = arith.negf %101 : vector<8x128xf32>
    %103 = math.exp %102 : vector<8x128xf32>
    %cst_22 = arith.constant 1.000000e+00 : f32
    %104 = vector.broadcast %cst_22 : f32 to vector<8x128xf32>
    %105 = arith.addf %104, %103 : vector<8x128xf32>
    %106 = arith.divf %104, %105 : vector<8x128xf32>
    %107 = math.tanh %101 : vector<8x128xf32>
    %108 = vector.extract_strided_slice %106 {offsets = [0, 0], sizes = [8, 32], strides = [1, 1]} : vector<8x128xf32> to vector<8x32xf32>
    %109 = vector.extract_strided_slice %106 {offsets = [0, 32], sizes = [8, 32], strides = [1, 1]} : vector<8x128xf32> to vector<8x32xf32>
    %110 = vector.extract_strided_slice %107 {offsets = [0, 64], sizes = [8, 32], strides = [1, 1]} : vector<8x128xf32> to vector<8x32xf32>
    %111 = vector.extract_strided_slice %106 {offsets = [0, 96], sizes = [8, 32], strides = [1, 1]} : vector<8x128xf32> to vector<8x32xf32>
    %112 = arith.mulf %109, %96 : vector<8x32xf32>
    %113 = arith.mulf %108, %110 : vector<8x32xf32>
    %114 = arith.addf %112, %113 : vector<8x32xf32>
    %115 = math.tanh %114 : vector<8x32xf32>
    %116 = arith.mulf %111, %115 : vector<8x32xf32>
    %117 = vector.extract_strided_slice %6 {offsets = [48, 0], sizes = [8, 128], strides = [1, 1]} : vector<64x128xf32> to vector<8x128xf32>
    %cst_23 = arith.constant dense<0.000000e+00> : vector<8x128xf32>
    %118 = tpu.matmul %116, %0, %cst_23 {dimension_numbers = #tpu.dot_dimension_numbers<[1], [0], [0], [1], [0, 0, 1, 1], [], []>} : vector<8x32xf32>, vector<32x128xf32>, vector<8x128xf32> -> vector<8x128xf32>
    %119 = arith.addf %117, %118 : vector<8x128xf32>
    %120 = arith.negf %119 : vector<8x128xf32>
    %121 = math.exp %120 : vector<8x128xf32>
    %cst_24 = arith.constant 1.000000e+00 : f32
    %122 = vector.broadcast %cst_24 : f32 to vector<8x128xf32>
    %123 = arith.addf %122, %121 : vector<8x128xf32>
    %124 = arith.divf %122, %123 : vector<8x128xf32>
    %125 = math.tanh %119 : vector<8x128xf32>
    %126 = vector.extract_strided_slice %124 {offsets = [0, 0], sizes = [8, 32], strides = [1, 1]} : vector<8x128xf32> to vector<8x32xf32>
    %127 = vector.extract_strided_slice %124 {offsets = [0, 32], sizes = [8, 32], strides = [1, 1]} : vector<8x128xf32> to vector<8x32xf32>
    %128 = vector.extract_strided_slice %125 {offsets = [0, 64], sizes = [8, 32], strides = [1, 1]} : vector<8x128xf32> to vector<8x32xf32>
    %129 = vector.extract_strided_slice %124 {offsets = [0, 96], sizes = [8, 32], strides = [1, 1]} : vector<8x128xf32> to vector<8x32xf32>
    %130 = arith.mulf %127, %114 : vector<8x32xf32>
    %131 = arith.mulf %126, %128 : vector<8x32xf32>
    %132 = arith.addf %130, %131 : vector<8x32xf32>
    %133 = math.tanh %132 : vector<8x32xf32>
    %134 = arith.mulf %129, %133 : vector<8x32xf32>
    %135 = vector.extract_strided_slice %6 {offsets = [56, 0], sizes = [8, 128], strides = [1, 1]} : vector<64x128xf32> to vector<8x128xf32>
    %cst_25 = arith.constant dense<0.000000e+00> : vector<8x128xf32>
    %136 = tpu.matmul %134, %0, %cst_25 {dimension_numbers = #tpu.dot_dimension_numbers<[1], [0], [0], [1], [0, 0, 1, 1], [], []>} : vector<8x32xf32>, vector<32x128xf32>, vector<8x128xf32> -> vector<8x128xf32>
    %137 = arith.addf %135, %136 : vector<8x128xf32>
    %138 = arith.negf %137 : vector<8x128xf32>
    %139 = math.exp %138 : vector<8x128xf32>
    %cst_26 = arith.constant 1.000000e+00 : f32
    %140 = vector.broadcast %cst_26 : f32 to vector<8x128xf32>
    %141 = arith.addf %140, %139 : vector<8x128xf32>
    %142 = arith.divf %140, %141 : vector<8x128xf32>
    %143 = math.tanh %137 : vector<8x128xf32>
    %144 = vector.extract_strided_slice %142 {offsets = [0, 0], sizes = [8, 32], strides = [1, 1]} : vector<8x128xf32> to vector<8x32xf32>
    %145 = vector.extract_strided_slice %142 {offsets = [0, 32], sizes = [8, 32], strides = [1, 1]} : vector<8x128xf32> to vector<8x32xf32>
    %146 = vector.extract_strided_slice %143 {offsets = [0, 64], sizes = [8, 32], strides = [1, 1]} : vector<8x128xf32> to vector<8x32xf32>
    %147 = vector.extract_strided_slice %142 {offsets = [0, 96], sizes = [8, 32], strides = [1, 1]} : vector<8x128xf32> to vector<8x32xf32>
    %148 = arith.mulf %145, %132 : vector<8x32xf32>
    %149 = arith.mulf %144, %146 : vector<8x32xf32>
    %150 = arith.addf %148, %149 : vector<8x32xf32>
    %151 = math.tanh %150 : vector<8x32xf32>
    %152 = arith.mulf %147, %151 : vector<8x32xf32>
    %c0_27 = arith.constant 0 : index
    %c0_28 = arith.constant 0 : index
    %153 = vector.load %arg9[%c0_27, %c0_28] : memref<8x32xf32, #tpu.memory_space<vmem>>, vector<8x32xf32>
    tpu.vector_store %arg9[%c0_27, %c0_28], %152 {strides = array<i32>} : memref<8x32xf32, #tpu.memory_space<vmem>>, vector<8x32xf32>,
    %c0_29 = arith.constant 0 : index
    %c0_30 = arith.constant 0 : index
    %154 = vector.load %arg10[%c0_29, %c0_30] : memref<8x32xf32, #tpu.memory_space<vmem>>, vector<8x32xf32>
    tpu.vector_store %arg10[%c0_29, %c0_30], %150 {strides = array<i32>} : memref<8x32xf32, #tpu.memory_space<vmem>>, vector<8x32xf32>,
    %155 = tpu.concatenate %26, %44, %62, %80, %98, %116, %134, %152 in 0 : vector<8x32xf32>, vector<8x32xf32>, vector<8x32xf32>, vector<8x32xf32>, vector<8x32xf32>, vector<8x32xf32>, vector<8x32xf32>, vector<8x32xf32> -> vector<64x32xf32>
    %156 = arith.truncf %155 : vector<64x32xf32> to vector<64x32xbf16>
    %c0_31 = arith.constant 0 : index
    %c0_32 = arith.constant 0 : index
    %157 = vector.load %arg6[%c0_31, %c0_32] : memref<32x128xbf16, #tpu.memory_space<vmem>>, vector<32x128xbf16>
    %cst_33 = arith.constant dense<0.000000e+00> : vector<64x128xf32>
    %158 = tpu.matmul %156, %157, %cst_33 {dimension_numbers = #tpu.dot_dimension_numbers<[1], [0], [0], [1], [0, 0, 1, 1], [], []>} : vector<64x32xbf16>, vector<32x128xbf16>, vector<64x128xf32> -> vector<64x128xf32>
    %c0_34 = arith.constant 0 : index
    %c0_35 = arith.constant 0 : index
    %159 = vector.load %arg7[%c0_34, %c0_35] : memref<1x128xf32, #tpu.memory_space<vmem>>, vector<1x128xf32>
    %160 = vector.broadcast %159 : vector<1x128xf32> to vector<64x128xf32>
    %161 = arith.addf %158, %160 : vector<64x128xf32>
    %c0_36 = arith.constant 0 : index
    %c0_37 = arith.constant 0 : index
    %162 = vector.load %arg8[%c0_36, %c0_37] : memref<64x128xf32, #tpu.memory_space<vmem>>, vector<64x128xf32>
    tpu.vector_store %arg8[%c0_36, %c0_37], %161 {strides = array<i32>} : memref<64x128xf32, #tpu.memory_space<vmem>>, vector<64x128xf32>,
    return
  }
}

</mosaic_0001>

<llo_original>
// kernel: lst_model_forward.1
$region0: #{lst_model_forward.1}
  #allocation0 [shape = 'u32[]', space=smem, size = 0x4, offset = 0x4, fixed_abs, tag = 'smem constant byte address 0x4 - core index']
  #allocation1 [shape = 'u32[72,128]{1,0:T(1,128)}', space=vmem, size = 0x9000, scoped, tag = 'internal scratch']
  %s0 = inlined_call_operand.vmem [shape: bf16[64,16], index: 0, kind: input, shape index: {}]
  %s1 = inlined_call_operand.vmem [shape: f32[8,32], index: 1, kind: input, shape index: {}]
  %s2 = inlined_call_operand.vmem [shape: f32[8,32], index: 2, kind: input, shape index: {}]
  %s3 = inlined_call_operand.vmem [shape: bf16[16,128], index: 3, kind: input, shape index: {}]
  %s4 = inlined_call_operand.vmem [shape: f32[32,128], index: 4, kind: input, shape index: {}]
  %s5 = inlined_call_operand.vmem [shape: f32[1,128], index: 5, kind: input, shape index: {}]
  %s6 = inlined_call_operand.vmem [shape: bf16[32,128], index: 6, kind: input, shape index: {}]
  %s7 = inlined_call_operand.vmem [shape: f32[1,128], index: 7, kind: input, shape index: {}]
  %s8 = inlined_call_operand.vmem [shape: f32[64,128], index: 8, kind: output, shape index: {0}]
  %s9 = inlined_call_operand.vmem [shape: f32[8,32], index: 9, kind: output, shape index: {1}]
  %s10 = inlined_call_operand.vmem [shape: f32[8,32], index: 10, kind: output, shape index: {2}]
  %11 = xla_tuple %s8, %s9, %s10
  %s12 = sld [smem:[#allocation0]]
  $region58: #{lst_model_forward.1} parent=0
    _
  %s14 = ssub.s32 1, %s12
  %s15 = scalar_select 0, %s14, %s12
  // Predicated region
  $region2: #{lst_model_forward.1} parent=0 // pred_check
    _
  $region3: #{lst_model_forward.1} parent=0 // pred_check_branch
    %17 = sbr.rel (0) target = $region5
  $region4: #{lst_model_forward.1} parent=0 // pred_region
    _
  $region5: #{lst_model_forward.1} parent=0 // pred_fallthru
    _
  // Predicated region
  $region6: #{lst_model_forward.1} parent=0 // pred_check
    _
  $region7: #{lst_model_forward.1} parent=0 // pred_check_branch
    %19 = sbr.rel (0) target = $region9
  $region8: #{lst_model_forward.1} parent=0 // pred_region
    _
  $region9: #{lst_model_forward.1} parent=0 // pred_fallthru
    _
  // Predicated region
  $region10: #{lst_model_forward.1} parent=0 // pred_check
    _
  $region11: #{lst_model_forward.1} parent=0 // pred_check_branch
    %21 = sbr.rel (0) target = $region13
  $region12: #{lst_model_forward.1} parent=0 // pred_region
    _
  $region13: #{lst_model_forward.1} parent=0 // pred_fallthru
    _
  // Predicated region
  $region14: #{lst_model_forward.1} parent=0 // pred_check
    _
  $region15: #{lst_model_forward.1} parent=0 // pred_check_branch
    %23 = sbr.rel (0) target = $region17
  $region16: #{lst_model_forward.1} parent=0 // pred_region
    _
  $region17: #{lst_model_forward.1} parent=0 // pred_fallthru
    _
  // Predicated region
  $region18: #{lst_model_forward.1} parent=0 // pred_check
    _
  $region19: #{lst_model_forward.1} parent=0 // pred_check_branch
    %25 = sbr.rel (0) target = $region21
  $region20: #{lst_model_forward.1} parent=0 // pred_region
    _
  $region21: #{lst_model_forward.1} parent=0 // pred_fallthru
    _
  // Predicated region
  $region22: #{lst_model_forward.1} parent=0 // pred_check
    _
  $region23: #{lst_model_forward.1} parent=0 // pred_check_branch
    %27 = sbr.rel (0) target = $region25
  $region24: #{lst_model_forward.1} parent=0 // pred_region
    _
  $region25: #{lst_model_forward.1} parent=0 // pred_fallthru
    _
  // Predicated region
  $region26: #{lst_model_forward.1} parent=0 // pred_check
    _
  $region27: #{lst_model_forward.1} parent=0 // pred_check_branch
    %29 = sbr.rel (0) target = $region29
  $region28: #{lst_model_forward.1} parent=0 // pred_region
    _
  $region29: #{lst_model_forward.1} parent=0 // pred_fallthru
    _
  // Predicated region
  $region30: #{lst_model_forward.1} parent=0 // pred_check
    _
  $region31: #{lst_model_forward.1} parent=0 // pred_check_branch
    %31 = sbr.rel (0) target = $region33
  $region32: #{lst_model_forward.1} parent=0 // pred_region
    _
  $region33: #{lst_model_forward.1} parent=0 // pred_fallthru
    _
  %v33 = vld [vmem:[%s4] sm:$0xff]
  %v34 = vld [vmem:[%s4 + $0x8] sm:$0xff]
  %v35 = vld [vmem:[%s4 + $0x10] sm:$0xff]
  %v36 = vld [vmem:[%s4 + $0x18] sm:$0xff]
  %v37 = vld [vmem:[%s0] sm:$0xf]
  %v38 = vld [vmem:[%s0 + $0x4] sm:$0xf]
  %v39 = vld [vmem:[%s0 + $0x8] sm:$0xf]
  %v40 = vld [vmem:[%s0 + $0xc] sm:$0xf]
  %v41 = vld [vmem:[%s0 + $0x10] sm:$0xf]
  %v42 = vld [vmem:[%s0 + $0x14] sm:$0xf]
  %v43 = vld [vmem:[%s0 + $0x18] sm:$0xf]
  %v44 = vld [vmem:[%s0 + $0x1c] sm:$0xf]
  %v45 = vld [vmem:[%s3] sm:$0xf]
  %v46 = vld [vmem:[%s3 + $0x4] sm:$0xf]
  %v47 = vld [vmem:[%s5] sm:$0x1]
  %v49 = vperm.slane %v47, 0
  %v59 = vunpack.c.l.b16 %v37
  %v60 = vunpack.c.l.b16 %v38
  %v61 = vunpack.c.l.b16 %v39
  %v62 = vunpack.c.l.b16 %v40
  %v63 = vunpack.c.l.b16 %v41
  %v64 = vunpack.c.l.b16 %v42
  %v65 = vunpack.c.l.b16 %v43
  %v66 = vunpack.c.l.b16 %v44
  %v67 = vpack.c.b16 %v60, %v59
  %v68 = vpack.c.b16 %v62, %v61
  %v69 = vpack.c.b16 %v64, %v63
  %v70 = vpack.c.b16 %v66, %v65
  %v73 = vunpack.c.l.b16 %v45
  %v74 = vunpack.c.l.b16 %v46
  %v75 = vpack.c.b16 %v74, %v73
  %vm77 = vcmask 130048
  %v79 = vsel %vm77, %v67, 0
  %v82 = vsel %vm77, %v68, 0
  %v85 = vsel %vm77, %v69, 0
  %v88 = vsel %vm77, %v70, 0
  %90 = vmatpush.bf16.msra.mxu0 0
  %91 = vmatpush.bf16.msra.mxu0 0
  %92 = vmatpush.bf16.msra.mxu0 0
  %93 = vmatpush.bf16.msra.mxu0 0
  %94 = vmatpush.bf16.msra.mxu0 0
  %95 = vmatpush.bf16.msra.mxu0 0
  %96 = vmatpush.bf16.msra.mxu0 0
  %97 = vmatpush.bf16.msra.mxu0 %v75
  %98 = vmatmul.bf16.gmra.mxu0 %v79
  %v99 = vpop.f32.mrf.mxu0
  %v100 = vadd.f32 %v49, %v99
  %v101 = vpop.f32.mrf.mxu0
  %v102 = vadd.f32 %v49, %v101
  %103 = vmatmul.bf16.gmra.mxu0 %v82
  %v104 = vpop.f32.mrf.mxu0
  %v105 = vadd.f32 %v49, %v104
  %v106 = vpop.f32.mrf.mxu0
  %v107 = vadd.f32 %v49, %v106
  %108 = vmatmul.bf16.gmra.mxu0 %v85
  %v109 = vpop.f32.mrf.mxu0
  %v110 = vadd.f32 %v49, %v109
  %v111 = vpop.f32.mrf.mxu0
  %v112 = vadd.f32 %v49, %v111
  %113 = vmatmul.bf16.gmra.mxu0 %v88
  %v114 = vpop.f32.mrf.mxu0
  %v115 = vadd.f32 %v49, %v114
  %v116 = vpop.f32.mrf.mxu0
  %v117 = vadd.f32 %v49, %v116
  %118 = vdwg.mxu0
  %v119 = vld [vmem:[%s1] sm:$0xff]
  %v120 = vld [vmem:[%s2] sm:$0xff]
  %vm121 = vcmask 261120
  %v123 = vsel %vm121, %v119, 0
  %125 = vmatpush.msra.mxu0 0.0
  %126 = vmatpush.msra.mxu0 0.0
  %127 = vmatpush.msra.mxu0 0.0
  %128 = vmatpush.msra.mxu0 0.0
  %129 = vmatpush.msra.mxu0 0.0
  %130 = vmatpush.msra.mxu0 0.0
  %131 = vmatpush.msra.mxu0 0.0
  %132 = vmatpush.msra.mxu0 0.0
  %133 = vmatpush.msra.mxu0 0.0
  %134 = vmatpush.msra.mxu0 0.0
  %135 = vmatpush.msra.mxu0 0.0
  %136 = vmatpush.msra.mxu0 0.0
  %137 = vmatpush.msra.mxu0 %v36
  %138 = vmatpush.msra.mxu0 %v35
  %139 = vmatpush.msra.mxu0 %v34
  %140 = vmatpush.msra.mxu0 %v33
  %141 = vmatmul.f32.gmra.mxu0 %v123
  %v142 = vpop.f32.mrf.mxu0
  %v143 = vadd.f32 0.0, %v142
  %144 = vdwg.mxu0
  %v145 = vadd.f32 %v100, %v143
  %v146 = vxor.u32 %v145, 2147483648
  %v147 = vmul.f32 %v146, 1.442695
  %v148 = vpow.pop %v147
  %v149 = vadd.f32 %v148, 1.0
  %v150 = vrcp.pop %v149
  %v151 = vmul.f32 %v149, %v150
  %v152 = vsub.f32 1.0, %v151
  %v153 = vmul.f32 %v150, %v152
  %v154 = vadd.f32 %v150, %v153
  %vm155 = vweird.f32 %v149
  %vm156 = vweird.f32 %v150
  %vm157 = vmor %vm155, %vm156
  %v158 = vsel %vm157, %v150, %v154
  %v159 = vand.u32 2147483647, %v149
  %vm160 = vcmp.eq.f32.partialorder %v159, 8.507059e+37
  %v161 = vand.u32 %v149, 2147483648
  %v162 = vor.u32 1.1754944e-38, %v161
  %v163 = vsel %vm160, %v162, %v158
  %v164 = vmul.f32 1.0, %v163
  %v165 = vtanh.pop %v145
  %167 = vrot.lane.b32.xlu0 %v120, 32
  %v168 = vpop.permute.xlu0 %167
  %v170 = vmul.f32 %v164, %v168
  %172 = vrot.lane.b32.xlu0 %v165, 64
  %v173 = vpop.permute.xlu0 %172
  %v175 = vmul.f32 %v164, %v173
  %177 = vrot.lane.b32.xlu0 %v175, 32
  %v178 = vpop.permute.xlu0 %177
  %v180 = vadd.f32 %v170, %v178
  %v181 = vtanh.pop %v180
  %183 = vrot.lane.b32.xlu0 %v181, 64
  %v184 = vpop.permute.xlu0 %183
  %v186 = vmul.f32 %v164, %v184
  %188 = vrot.lane.b32.xlu0 %v186, 32
  %v189 = vpop.permute.xlu0 %188
  %v190 = vsel %vm121, %v189, 0
  %192 = vmatpush.msra.mxu0 0.0
  %193 = vmatpush.msra.mxu0 0.0
  %194 = vmatpush.msra.mxu0 0.0
  %195 = vmatpush.msra.mxu0 0.0
  %196 = vmatpush.msra.mxu0 0.0
  %197 = vmatpush.msra.mxu0 0.0
  %198 = vmatpush.msra.mxu0 0.0
  %199 = vmatpush.msra.mxu0 0.0
  %200 = vmatpush.msra.mxu0 0.0
  %201 = vmatpush.msra.mxu0 0.0
  %202 = vmatpush.msra.mxu0 0.0
  %203 = vmatpush.msra.mxu0 0.0
  %204 = vmatpush.msra.mxu0 %v36
  %205 = vmatpush.msra.mxu0 %v35
  %206 = vmatpush.msra.mxu0 %v34
  %207 = vmatpush.msra.mxu0 %v33
  %208 = vmatmul.f32.gmra.mxu0 %v190
  %v209 = vpop.f32.mrf.mxu0
  %v210 = vadd.f32 0.0, %v209
  %211 = vdwg.mxu0
  %v212 = vadd.f32 %v102, %v210
  %v213 = vxor.u32 %v212, 2147483648
  %v214 = vmul.f32 %v213, 1.442695
  %v215 = vpow.pop %v214
  %v216 = vadd.f32 %v215, 1.0
  %v217 = vrcp.pop %v216
  %v218 = vmul.f32 %v216, %v217
  %v219 = vsub.f32 1.0, %v218
  %v220 = vmul.f32 %v217, %v219
  %v221 = vadd.f32 %v217, %v220
  %vm222 = vweird.f32 %v216
  %vm223 = vweird.f32 %v217
  %vm224 = vmor %vm222, %vm223
  %v225 = vsel %vm224, %v217, %v221
  %v226 = vand.u32 2147483647, %v216
  %vm227 = vcmp.eq.f32.partialorder %v226, 8.507059e+37
  %v228 = vand.u32 %v216, 2147483648
  %v229 = vor.u32 1.1754944e-38, %v228
  %v230 = vsel %vm227, %v229, %v225
  %v231 = vmul.f32 1.0, %v230
  %v232 = vtanh.pop %v212
  %v233 = vmul.f32 %v231, %v180
  %235 = vrot.lane.b32.xlu0 %v232, 64
  %v236 = vpop.permute.xlu0 %235
  %v238 = vmul.f32 %v231, %v236
  %240 = vrot.lane.b32.xlu0 %v238, 32
  %v241 = vpop.permute.xlu0 %240
  %v243 = vadd.f32 %v233, %v241
  %v244 = vtanh.pop %v243
  %246 = vrot.lane.b32.xlu0 %v244, 64
  %v247 = vpop.permute.xlu0 %246
  %v249 = vmul.f32 %v231, %v247
  %251 = vrot.lane.b32.xlu0 %v249, 32
  %v252 = vpop.permute.xlu0 %251
  %v253 = vsel %vm121, %v252, 0
  %255 = vmatpush.msra.mxu0 0.0
  %256 = vmatpush.msra.mxu0 0.0
  %257 = vmatpush.msra.mxu0 0.0
  %258 = vmatpush.msra.mxu0 0.0
  %259 = vmatpush.msra.mxu0 0.0
  %260 = vmatpush.msra.mxu0 0.0
  %261 = vmatpush.msra.mxu0 0.0
  %262 = vmatpush.msra.mxu0 0.0
  %263 = vmatpush.msra.mxu0 0.0
  %264 = vmatpush.msra.mxu0 0.0
  %265 = vmatpush.msra.mxu0 0.0
  %266 = vmatpush.msra.mxu0 0.0
  %267 = vmatpush.msra.mxu0 %v36
  %268 = vmatpush.msra.mxu0 %v35
  %269 = vmatpush.msra.mxu0 %v34
  %270 = vmatpush.msra.mxu0 %v33
  %271 = vmatmul.f32.gmra.mxu0 %v253
  %v272 = vpop.f32.mrf.mxu0
  %v273 = vadd.f32 0.0, %v272
  %274 = vdwg.mxu0
  %v275 = vadd.f32 %v105, %v273
  %v276 = vxor.u32 %v275, 2147483648
  %v277 = vmul.f32 %v276, 1.442695
  %v278 = vpow.pop %v277
  %v279 = vadd.f32 %v278, 1.0
  %v280 = vrcp.pop %v279
  %v281 = vmul.f32 %v279, %v280
  %v282 = vsub.f32 1.0, %v281
  %v283 = vmul.f32 %v280, %v282
  %v284 = vadd.f32 %v280, %v283
  %vm285 = vweird.f32 %v279
  %vm286 = vweird.f32 %v280
  %vm287 = vmor %vm285, %vm286
  %v288 = vsel %vm287, %v280, %v284
  %v289 = vand.u32 2147483647, %v279
  %vm290 = vcmp.eq.f32.partialorder %v289, 8.507059e+37
  %v291 = vand.u32 %v279, 2147483648
  %v292 = vor.u32 1.1754944e-38, %v291
  %v293 = vsel %vm290, %v292, %v288
  %v294 = vmul.f32 1.0, %v293
  %v295 = vtanh.pop %v275
  %v296 = vmul.f32 %v294, %v243
  %298 = vrot.lane.b32.xlu0 %v295, 64
  %v299 = vpop.permute.xlu0 %298
  %v301 = vmul.f32 %v294, %v299
  %303 = vrot.lane.b32.xlu0 %v301, 32
  %v304 = vpop.permute.xlu0 %303
  %v306 = vadd.f32 %v296, %v304
  %v307 = vtanh.pop %v306
  %309 = vrot.lane.b32.xlu0 %v307, 64
  %v310 = vpop.permute.xlu0 %309
  %v312 = vmul.f32 %v294, %v310
  %314 = vrot.lane.b32.xlu0 %v312, 32
  %v315 = vpop.permute.xlu0 %314
  %v316 = vsel %vm121, %v315, 0
  %318 = vmatpush.msra.mxu0 0.0
  %319 = vmatpush.msra.mxu0 0.0
  %320 = vmatpush.msra.mxu0 0.0
  %321 = vmatpush.msra.mxu0 0.0
  %322 = vmatpush.msra.mxu0 0.0
  %323 = vmatpush.msra.mxu0 0.0
  %324 = vmatpush.msra.mxu0 0.0
  %325 = vmatpush.msra.mxu0 0.0
  %326 = vmatpush.msra.mxu0 0.0
  %327 = vmatpush.msra.mxu0 0.0
  %328 = vmatpush.msra.mxu0 0.0
  %329 = vmatpush.msra.mxu0 0.0
  %330 = vmatpush.msra.mxu0 %v36
  %331 = vmatpush.msra.mxu0 %v35
  %332 = vmatpush.msra.mxu0 %v34
  %333 = vmatpush.msra.mxu0 %v33
  %334 = vmatmul.f32.gmra.mxu0 %v316
  %v335 = vpop.f32.mrf.mxu0
  %v336 = vadd.f32 0.0, %v335
  %337 = vdwg.mxu0
  %v338 = vadd.f32 %v107, %v336
  %v339 = vxor.u32 %v338, 2147483648
  %v340 = vmul.f32 %v339, 1.442695
  %v341 = vpow.pop %v340
  %v342 = vadd.f32 %v341, 1.0
  %v343 = vrcp.pop %v342
  %v344 = vmul.f32 %v342, %v343
  %v345 = vsub.f32 1.0, %v344
  %v346 = vmul.f32 %v343, %v345
  %v347 = vadd.f32 %v343, %v346
  %vm348 = vweird.f32 %v342
  %vm349 = vweird.f32 %v343
  %vm350 = vmor %vm348, %vm349
  %v351 = vsel %vm350, %v343, %v347
  %v352 = vand.u32 2147483647, %v342
  %vm353 = vcmp.eq.f32.partialorder %v352, 8.507059e+37
  %v354 = vand.u32 %v342, 2147483648
  %v355 = vor.u32 1.1754944e-38, %v354
  %v356 = vsel %vm353, %v355, %v351
  %v357 = vmul.f32 1.0, %v356
  %v358 = vtanh.pop %v338
  %v359 = vmul.f32 %v357, %v306
  %361 = vrot.lane.b32.xlu0 %v358, 64
  %v362 = vpop.permute.xlu0 %361
  %v364 = vmul.f32 %v357, %v362
  %366 = vrot.lane.b32.xlu0 %v364, 32
  %v367 = vpop.permute.xlu0 %366
  %v369 = vadd.f32 %v359, %v367
  %v370 = vtanh.pop %v369
  %372 = vrot.lane.b32.xlu0 %v370, 64
  %v373 = vpop.permute.xlu0 %372
  %v375 = vmul.f32 %v357, %v373
  %377 = vrot.lane.b32.xlu0 %v375, 32
  %v378 = vpop.permute.xlu0 %377
  %v379 = vsel %vm121, %v378, 0
  %381 = vmatpush.msra.mxu0 0.0
  %382 = vmatpush.msra.mxu0 0.0
  %383 = vmatpush.msra.mxu0 0.0
  %384 = vmatpush.msra.mxu0 0.0
  %385 = vmatpush.msra.mxu0 0.0
  %386 = vmatpush.msra.mxu0 0.0
  %387 = vmatpush.msra.mxu0 0.0
  %388 = vmatpush.msra.mxu0 0.0
  %389 = vmatpush.msra.mxu0 0.0
  %390 = vmatpush.msra.mxu0 0.0
  %391 = vmatpush.msra.mxu0 0.0
  %392 = vmatpush.msra.mxu0 0.0
  %393 = vmatpush.msra.mxu0 %v36
  %394 = vmatpush.msra.mxu0 %v35
  %395 = vmatpush.msra.mxu0 %v34
  %396 = vmatpush.msra.mxu0 %v33
  %397 = vmatmul.f32.gmra.mxu0 %v379
  %v398 = vpop.f32.mrf.mxu0
  %v399 = vadd.f32 0.0, %v398
  %400 = vdwg.mxu0
  %v401 = vadd.f32 %v110, %v399
  %v402 = vxor.u32 %v401, 2147483648
  %v403 = vmul.f32 %v402, 1.442695
  %v404 = vpow.pop %v403
  %v405 = vadd.f32 %v404, 1.0
  %v406 = vrcp.pop %v405
  %v407 = vmul.f32 %v405, %v406
  %v408 = vsub.f32 1.0, %v407
  %v409 = vmul.f32 %v406, %v408
  %v410 = vadd.f32 %v406, %v409
  %vm411 = vweird.f32 %v405
  %vm412 = vweird.f32 %v406
  %vm413 = vmor %vm411, %vm412
  %v414 = vsel %vm413, %v406, %v410
  %v415 = vand.u32 2147483647, %v405
  %vm416 = vcmp.eq.f32.partialorder %v415, 8.507059e+37
  %v417 = vand.u32 %v405, 2147483648
  %v418 = vor.u32 1.1754944e-38, %v417
  %v419 = vsel %vm416, %v418, %v414
  %v420 = vmul.f32 1.0, %v419
  %v421 = vtanh.pop %v401
  %v422 = vmul.f32 %v420, %v369
  %424 = vrot.lane.b32.xlu0 %v421, 64
  %v425 = vpop.permute.xlu0 %424
  %v427 = vmul.f32 %v420, %v425
  %429 = vrot.lane.b32.xlu0 %v427, 32
  %v430 = vpop.permute.xlu0 %429
  %v432 = vadd.f32 %v422, %v430
  %v433 = vtanh.pop %v432
  %435 = vrot.lane.b32.xlu0 %v433, 64
  %v436 = vpop.permute.xlu0 %435
  %v438 = vmul.f32 %v420, %v436
  %440 = vrot.lane.b32.xlu0 %v438, 32
  %v441 = vpop.permute.xlu0 %440
  %v442 = vsel %vm121, %v441, 0
  %444 = vmatpush.msra.mxu0 0.0
  %445 = vmatpush.msra.mxu0 0.0
  %446 = vmatpush.msra.mxu0 0.0
  %447 = vmatpush.msra.mxu0 0.0
  %448 = vmatpush.msra.mxu0 0.0
  %449 = vmatpush.msra.mxu0 0.0
  %450 = vmatpush.msra.mxu0 0.0
  %451 = vmatpush.msra.mxu0 0.0
  %452 = vmatpush.msra.mxu0 0.0
  %453 = vmatpush.msra.mxu0 0.0
  %454 = vmatpush.msra.mxu0 0.0
  %455 = vmatpush.msra.mxu0 0.0
  %456 = vmatpush.msra.mxu0 %v36
  %457 = vmatpush.msra.mxu0 %v35
  %458 = vmatpush.msra.mxu0 %v34
  %459 = vmatpush.msra.mxu0 %v33
  %460 = vmatmul.f32.gmra.mxu0 %v442
  %v461 = vpop.f32.mrf.mxu0
  %v462 = vadd.f32 0.0, %v461
  %463 = vdwg.mxu0
  %v464 = vadd.f32 %v112, %v462
  %v465 = vxor.u32 %v464, 2147483648
  %v466 = vmul.f32 %v465, 1.442695
  %v467 = vpow.pop %v466
  %v468 = vadd.f32 %v467, 1.0
  %v469 = vrcp.pop %v468
  %v470 = vmul.f32 %v468, %v469
  %v471 = vsub.f32 1.0, %v470
  %v472 = vmul.f32 %v469, %v471
  %v473 = vadd.f32 %v469, %v472
  %vm474 = vweird.f32 %v468
  %vm475 = vweird.f32 %v469
  %vm476 = vmor %vm474, %vm475
  %v477 = vsel %vm476, %v469, %v473
  %v478 = vand.u32 2147483647, %v468
  %vm479 = vcmp.eq.f32.partialorder %v478, 8.507059e+37
  %v480 = vand.u32 %v468, 2147483648
  %v481 = vor.u32 1.1754944e-38, %v480
  %v482 = vsel %vm479, %v481, %v477
  %v483 = vmul.f32 1.0, %v482
  %v484 = vtanh.pop %v464
  %v485 = vmul.f32 %v483, %v432
  %487 = vrot.lane.b32.xlu0 %v484, 64
  %v488 = vpop.permute.xlu0 %487
  %v490 = vmul.f32 %v483, %v488
  %492 = vrot.lane.b32.xlu0 %v490, 32
  %v493 = vpop.permute.xlu0 %492
  %v495 = vadd.f32 %v485, %v493
  %v496 = vtanh.pop %v495
  %498 = vrot.lane.b32.xlu0 %v496, 64
  %v499 = vpop.permute.xlu0 %498
  %v501 = vmul.f32 %v483, %v499
  %503 = vrot.lane.b32.xlu0 %v501, 32
  %v504 = vpop.permute.xlu0 %503
  %v505 = vsel %vm121, %v504, 0
  %507 = vmatpush.msra.mxu0 0.0
  %508 = vmatpush.msra.mxu0 0.0
  %509 = vmatpush.msra.mxu0 0.0
  %510 = vmatpush.msra.mxu0 0.0
  %511 = vmatpush.msra.mxu0 0.0
  %512 = vmatpush.msra.mxu0 0.0
  %513 = vmatpush.msra.mxu0 0.0
  %514 = vmatpush.msra.mxu0 0.0
  %515 = vmatpush.msra.mxu0 0.0
  %516 = vmatpush.msra.mxu0 0.0
  %517 = vmatpush.msra.mxu0 0.0
  %518 = vmatpush.msra.mxu0 0.0
  %519 = vmatpush.msra.mxu0 %v36
  %520 = vmatpush.msra.mxu0 %v35
  %521 = vmatpush.msra.mxu0 %v34
  %522 = vmatpush.msra.mxu0 %v33
  %523 = vmatmul.f32.gmra.mxu0 %v505
  %v524 = vpop.f32.mrf.mxu0
  %v525 = vadd.f32 0.0, %v524
  %526 = vdwg.mxu0
  %v527 = vadd.f32 %v115, %v525
  %v528 = vxor.u32 %v527, 2147483648
  %v529 = vmul.f32 %v528, 1.442695
  %v530 = vpow.pop %v529
  %v531 = vadd.f32 %v530, 1.0
  %v532 = vrcp.pop %v531
  %v533 = vmul.f32 %v531, %v532
  %v534 = vsub.f32 1.0, %v533
  %v535 = vmul.f32 %v532, %v534
  %v536 = vadd.f32 %v532, %v535
  %vm537 = vweird.f32 %v531
  %vm538 = vweird.f32 %v532
  %vm539 = vmor %vm537, %vm538
  %v540 = vsel %vm539, %v532, %v536
  %v541 = vand.u32 2147483647, %v531
  %vm542 = vcmp.eq.f32.partialorder %v541, 8.507059e+37
  %v543 = vand.u32 %v531, 2147483648
  %v544 = vor.u32 1.1754944e-38, %v543
  %v545 = vsel %vm542, %v544, %v540
  %v546 = vmul.f32 1.0, %v545
  %v547 = vtanh.pop %v527
  %v548 = vmul.f32 %v546, %v495
  %550 = vrot.lane.b32.xlu0 %v547, 64
  %v551 = vpop.permute.xlu0 %550
  %v553 = vmul.f32 %v546, %v551
  %555 = vrot.lane.b32.xlu0 %v553, 32
  %v556 = vpop.permute.xlu0 %555
  %v558 = vadd.f32 %v548, %v556
  %v559 = vtanh.pop %v558
  %561 = vrot.lane.b32.xlu0 %v559, 64
  %v562 = vpop.permute.xlu0 %561
  %v564 = vmul.f32 %v546, %v562
  %566 = vrot.lane.b32.xlu0 %v564, 32
  %v567 = vpop.permute.xlu0 %566
  %v568 = vsel %vm121, %v567, 0
  %570 = vmatpush.msra.mxu0 0.0
  %571 = vmatpush.msra.mxu0 0.0
  %572 = vmatpush.msra.mxu0 0.0
  %573 = vmatpush.msra.mxu0 0.0
  %574 = vmatpush.msra.mxu0 0.0
  %575 = vmatpush.msra.mxu0 0.0
  %576 = vmatpush.msra.mxu0 0.0
  %577 = vmatpush.msra.mxu0 0.0
  %578 = vmatpush.msra.mxu0 0.0
  %579 = vmatpush.msra.mxu0 0.0
  %580 = vmatpush.msra.mxu0 0.0
  %581 = vmatpush.msra.mxu0 0.0
  %582 = vmatpush.msra.mxu0 %v36
  %583 = vmatpush.msra.mxu0 %v35
  %584 = vmatpush.msra.mxu0 %v34
  %585 = vmatpush.msra.mxu0 %v33
  %586 = vmatmul.f32.gmra.mxu0 %v568
  %v587 = vpop.f32.mrf.mxu0
  %v588 = vadd.f32 0.0, %v587
  %589 = vdwg.mxu0
  %v590 = vadd.f32 %v117, %v588
  %v591 = vxor.u32 %v590, 2147483648
  %v592 = vmul.f32 %v591, 1.442695
  %v593 = vpow.pop %v592
  %v594 = vadd.f32 %v593, 1.0
  %v595 = vrcp.pop %v594
  %v596 = vmul.f32 %v594, %v595
  %v597 = vsub.f32 1.0, %v596
  %v598 = vmul.f32 %v595, %v597
  %v599 = vadd.f32 %v595, %v598
  %vm600 = vweird.f32 %v594
  %vm601 = vweird.f32 %v595
  %vm602 = vmor %vm600, %vm601
  %v603 = vsel %vm602, %v595, %v599
  %v604 = vand.u32 2147483647, %v594
  %vm605 = vcmp.eq.f32.partialorder %v604, 8.507059e+37
  %v606 = vand.u32 %v594, 2147483648
  %v607 = vor.u32 1.1754944e-38, %v606
  %v608 = vsel %vm605, %v607, %v603
  %v609 = vmul.f32 1.0, %v608
  %v610 = vtanh.pop %v590
  %v611 = vmul.f32 %v609, %v558
  %613 = vrot.lane.b32.xlu0 %v610, 64
  %v614 = vpop.permute.xlu0 %613
  %v616 = vmul.f32 %v609, %v614
  %618 = vrot.lane.b32.xlu0 %v616, 32
  %v619 = vpop.permute.xlu0 %618
  %v621 = vadd.f32 %v611, %v619
  %v622 = vtanh.pop %v621
  %624 = vrot.lane.b32.xlu0 %v622, 64
  %v625 = vpop.permute.xlu0 %624
  %v627 = vmul.f32 %v609, %v625
  %629 = vrot.lane.b32.xlu0 %v627, 32
  %v630 = vpop.permute.xlu0 %629
  %632 = vst.msk [vmem:[%s9] sm:$0xff] %vm121, %v630
  %634 = vrot.lane.b32.xlu0 %v621, 96
  %v635 = vpop.permute.xlu0 %634
  %637 = vst.msk [vmem:[%s10] sm:$0xff] %vm121, %v635
  %v638 = vpack.c.bf16 %v249, %v186
  %v639 = vpack.c.bf16 %v375, %v312
  %v640 = vpack.c.bf16 %v501, %v438
  %v641 = vpack.c.bf16 %v627, %v564
  %v642 = vld [vmem:[%s6] sm:$0xf]
  %v643 = vld [vmem:[%s6 + $0x4] sm:$0xf]
  %v644 = vld [vmem:[%s6 + $0x8] sm:$0xf]
  %v645 = vld [vmem:[%s6 + $0xc] sm:$0xf]
  %v646 = vld [vmem:[%s7] sm:$0x1]
  %v648 = vperm.slane %v646, 0
  %654 = vrot.lane.b32.xlu0 %v638, 32
  %v655 = vpop.permute.xlu0 %654
  %656 = vrot.lane.b32.xlu0 %v639, 32
  %v657 = vpop.permute.xlu0 %656
  %658 = vrot.lane.b32.xlu0 %v640, 32
  %v659 = vpop.permute.xlu0 %658
  %660 = vrot.lane.b32.xlu0 %v641, 32
  %v661 = vpop.permute.xlu0 %660
  %v666 = vunpack.c.l.b16 %v642
  %v667 = vunpack.c.l.b16 %v643
  %v668 = vunpack.c.l.b16 %v644
  %v669 = vunpack.c.l.b16 %v645
  %v670 = vpack.c.b16 %v667, %v666
  %v671 = vpack.c.b16 %v669, %v668
  %v675 = vsel %vm121, %v655, 0
  %v678 = vsel %vm121, %v657, 0
  %v681 = vsel %vm121, %v659, 0
  %v684 = vsel %vm121, %v661, 0
  %686 = vmatpush.bf16.msra.mxu0 0
  %687 = vmatpush.bf16.msra.mxu0 0
  %688 = vmatpush.bf16.msra.mxu0 0
  %689 = vmatpush.bf16.msra.mxu0 0
  %690 = vmatpush.bf16.msra.mxu0 0
  %691 = vmatpush.bf16.msra.mxu0 0
  %692 = vmatpush.bf16.msra.mxu0 %v671
  %693 = vmatpush.bf16.msra.mxu0 %v670
  %694 = vmatmul.bf16.gmra.mxu0 %v675
  %v695 = vpop.f32.mrf.mxu0
  %v696 = vadd.f32 %v648, %v695
  %v697 = vpop.f32.mrf.mxu0
  %v698 = vadd.f32 %v648, %v697
  %699 = vmatmul.bf16.gmra.mxu0 %v678
  %v700 = vpop.f32.mrf.mxu0
  %v701 = vadd.f32 %v648, %v700
  %v702 = vpop.f32.mrf.mxu0
  %v703 = vadd.f32 %v648, %v702
  %704 = vmatmul.bf16.gmra.mxu0 %v681
  %v705 = vpop.f32.mrf.mxu0
  %v706 = vadd.f32 %v648, %v705
  %v707 = vpop.f32.mrf.mxu0
  %v708 = vadd.f32 %v648, %v707
  %709 = vmatmul.bf16.gmra.mxu0 %v684
  %v710 = vpop.f32.mrf.mxu0
  %v711 = vadd.f32 %v648, %v710
  %v712 = vpop.f32.mrf.mxu0
  %v713 = vadd.f32 %v648, %v712
  %714 = vdwg.mxu0
  %715 = vst [vmem:[%s8] sm:$0xff] %v696
  %716 = vst [vmem:[%s8 + $0x8] sm:$0xff] %v698
  %717 = vst [vmem:[%s8 + $0x10] sm:$0xff] %v701
  %718 = vst [vmem:[%s8 + $0x18] sm:$0xff] %v703
  %719 = vst [vmem:[%s8 + $0x20] sm:$0xff] %v706
  %720 = vst [vmem:[%s8 + $0x28] sm:$0xff] %v708
  %721 = vst [vmem:[%s8 + $0x30] sm:$0xff] %v711
  %722 = vst [vmem:[%s8 + $0x38] sm:$0xff] %v713
  // Predicated region
  $region34: #{lst_model_forward.1} parent=0 // pred_check
    _
  $region35: #{lst_model_forward.1} parent=0 // pred_check_branch
    %724 = sbr.rel (0) target = $region37
  $region36: #{lst_model_forward.1} parent=0 // pred_region
    _
  $region37: #{lst_model_forward.1} parent=0 // pred_fallthru
    _
  // Predicated region
  $region38: #{lst_model_forward.1} parent=0 // pred_check
    _
  $region39: #{lst_model_forward.1} parent=0 // pred_check_branch
    %726 = sbr.rel (0) target = $region41
  $region40: #{lst_model_forward.1} parent=0 // pred_region
    _
  $region41: #{lst_model_forward.1} parent=0 // pred_fallthru
    _
  // Predicated region
  $region42: #{lst_model_forward.1} parent=0 // pred_check
    _
  $region43: #{lst_model_forward.1} parent=0 // pred_check_branch
    %728 = sbr.rel (0) target = $region45
  $region44: #{lst_model_forward.1} parent=0 // pred_region
    _
  $region45: #{lst_model_forward.1} parent=0 // pred_fallthru
    _
  // Predicated region
  $region46: #{lst_model_forward.1} parent=0 // pred_check
    _
  $region47: #{lst_model_forward.1} parent=0 // pred_check_branch
    %730 = sbr.rel (0) target = $region49
  $region48: #{lst_model_forward.1} parent=0 // pred_region
    _
  $region49: #{lst_model_forward.1} parent=0 // pred_fallthru
    _
  // Predicated region
  $region50: #{lst_model_forward.1} parent=0 // pred_check
    _
  $region51: #{lst_model_forward.1} parent=0 // pred_check_branch
    %732 = sbr.rel (0) target = $region53
  $region52: #{lst_model_forward.1} parent=0 // pred_region
    _
  $region53: #{lst_model_forward.1} parent=0 // pred_fallthru
    _
  // Predicated region
  $region54: #{lst_model_forward.1} parent=0 // pred_check
    _
  $region55: #{lst_model_forward.1} parent=0 // pred_check_branch
    %734 = sbr.rel (0) target = $region57
  $region56: #{lst_model_forward.1} parent=0 // pred_region
    _
  $region57: #{lst_model_forward.1} parent=0 // pred_fallthru
    _

</llo_original>
